<compile_context>
chip_gen: v6e
topology: v6e:2x2x1
jax: 0.10.0
libtpu: 0.0.40
codegen_flags: <defaults>
</compile_context>

<pallas_src>
import numpy as np
import jax
import jax.numpy as jnp
from jax.experimental import pallas as pl
from jax.experimental.pallas import tpu as pltpu

DECAY = 0.2

# ------------------------- cell configuration ------------------------------
STEPS = 2
BLOCK_MULTIPLIER = 2
PREV_PREV_FM = 3          # C_prev_prev = block_multiplier * prev_prev_fm = 6
PREV_FM = 2               # C_prev      = block_multiplier * prev_fm      = 4
FILTER_MULTIPLIER = 4     # C_out       = filter_multiplier               = 4
DOWNUP_SAMPLE = 0

C_PREV_PREV = BLOCK_MULTIPLIER * PREV_PREV_FM
C_PREV = BLOCK_MULTIPLIER * PREV_FM
C_OUT = FILTER_MULTIPLIER

PRIMITIVES = ['skip_connect', 'snn_b3']
# rows: (branch_index, primitive_index), already sorted by branch index
CELL_ARCH = np.array([[0, 1],
                      [1, 1],
                      [3, 1],
                      [4, 0]], dtype=np.int32)

# MXU operand dtype (fp32 accumulation is kept via preferred_element_type).
MXU_DTYPE = jnp.bfloat16


# ----------------------------- fused kernel --------------------------------
def _make_cell_kernel(H, W, has_mem_in, mem_output):
    """Build the single fused cell kernel for a given spatial size.

    Per batch element:
      x_ref   : (1, C_pp+C_p, H*W) f32   [s0 channels ; s1 channels], lane-dense
      w_ref   : (9, 2*C_OUT, C_pp+C_p) bf16  BN-folded per-tap conv weights
      b_ref   : (2*C_OUT, 1) f32             combined BN biases
      m_ref   : (9, 1, H*W) f32              zero-pad validity masks per tap
      [mem_in_ref : (1, 2*C_OUT, H*W) f32]   previous membrane (if not is_first)
      spk_ref : (1, 2*C_OUT, H*W) f32        concat([spike_step0, spike_step1])
      [mem_out_ref : (1, 2*C_OUT, H*W) f32]  residual membrane state
    """
    HW = H * W
    offsets = [(dh, dw) for dh in (-1, 0, 1) for dw in (-1, 0, 1)]   # kh, kw order
    shifts = [(-(dh * W + dw)) % HW for dh, dw in offsets]

    def kernel(x_ref, w_ref, b_ref, m_ref, *rest):
        rest = list(rest)
        mem_in_ref = rest.pop(0) if has_mem_in else None
        spk_ref = rest.pop(0)
        mem_out_ref = None if mem_output else rest.pop(0)

        x = x_ref[0]                          # (C_pp+C_p, HW) f32
        rows = w_ref.shape[1]                 # 2 * C_OUT
        c = rows // 2

        # 3x3 conv (pad=1) for all three ops at once: 9 lane-rolled views of the
        # flattened feature map, zero-padding via precomputed masks, one small
        # MXU matmul per tap accumulated in fp32.
        acc = jnp.zeros((rows, HW), jnp.float32)
        for k, s in enumerate(shifts):
            shifted = x if s == 0 else pltpu.roll(x, shift=s, axis=1)
            patch = (shifted * m_ref[k]).astype(MXU_DTYPE)
            acc = acc + jnp.dot(w_ref[k], patch,
                                preferred_element_type=jnp.float32)
        pre = acc + b_ref[...]                # rows 0:c = conv(s0)+conv(s1) (step 0)
                                              # rows c:  = conv(s1)          (step 1)

        if mem_output:                        # param['mem_output']: spike = s
            s_step0 = pre[0:c]
            spk_ref[0, 0:c] = s_step0
            spk_ref[0, c:rows] = pre[c:rows] + s_step0   # skip_connect passes raw s
            return

        # ---- step 0: mem += s ; spike = (mem > 0) ; mem *= decay*(1-spike) ----
        mem0 = pre[0:c]
        if has_mem_in:
            mem0 = mem0 + mem_in_ref[0, 0:c]
        spike0 = (mem0 > 0.0).astype(jnp.float32)

        # ---- step 1: s = conv(s1) + skip_connect(spike0) ----
        mem1 = pre[c:rows] + spike0
        if has_mem_in:
            mem1 = mem1 + mem_in_ref[0, c:rows]
        spike1 = (mem1 > 0.0).astype(jnp.float32)

        spk_ref[0, 0:c] = spike0
        spk_ref[0, c:rows] = spike1
        mem_out_ref[0, 0:c] = mem0 * DECAY * (1.0 - spike0)
        mem_out_ref[0, c:rows] = mem1 * DECAY * (1.0 - spike1)

    return kernel


def _build_shift_masks(H, W):
    """(9, 1, H*W) validity masks: 1.0 where the (dh, dw)-shifted pixel is in
    bounds (i.e. where the 3x3 conv tap reads real data, not zero padding)."""
    p = np.arange(H * W)
    h, w = p // W, p % W
    masks = []
    for dh in (-1, 0, 1):
        for dw in (-1, 0, 1):
            valid = ((h + dh >= 0) & (h + dh < H) &
                     (w + dw >= 0) & (w + dw < W))
            masks.append(valid.astype(np.float32))
    return jnp.asarray(np.stack(masks)[:, None, :])


# --------------------------- parameter init --------------------------------
def init_cell_params(key):
    """Per-op params (fp32), mirroring the OPS selected by CELL_ARCH."""
    ops = []
    ki = key
    for row in CELL_ARCH:
        branch, prim = int(row[0]), int(row[1])
        if PRIMITIVES[prim] == 'skip_connect':
            ops.append(('identity', None))
            continue
        if branch in (0, 2, 5):
            c_in = C_PREV_PREV
        elif branch in (1, 3, 6):
            c_in = C_PREV
        else:
            c_in = C_OUT
        ki, k1, k2, k3 = jax.random.split(ki, 4)
        w = jax.random.normal(k1, (3, 3, c_in, C_OUT), jnp.float32) / np.sqrt(9.0 * c_in)
        gamma = 1.0 + 0.1 * jax.random.normal(k2, (C_OUT,), jnp.float32)
        beta = 0.1 * jax.random.normal(k3, (C_OUT,), jnp.float32)
        ops.append(('conv3x3', {'w': w, 'gamma': gamma, 'beta': beta}))
    return ops


def fuse_cell_params(op_params):
    """Fold BN scale into the conv weights (exact, fp32) and pack all three cell
    convs into one per-tap weight tensor consumed by the fused kernel:
        w_all[k] : (2*C_OUT, C_PREV_PREV + C_PREV),  k = kh*3 + kw
        rows 0:C_OUT        -> step-0 branch sum = conv(s0) + conv(s1)
        rows C_OUT:2*C_OUT  -> step-1 conv(s1)   (s0 columns are zero)
    Weights are cast to bf16 AFTER the fp32 fold (MXU operands, fp32 accumulate).
    """
    (_, p0), (_, p1), (_, p2), (kind3, _) = op_params
    assert kind3 == 'identity'

    def fold_t(p, c_in):                                   # (9, C_OUT, c_in) fp32
        wf = p['w'] * p['gamma'][None, None, None, :]      # BN scale fold (fp32)
        return jnp.transpose(wf.reshape(9, c_in, C_OUT), (0, 2, 1))

    w0 = fold_t(p0, C_PREV_PREV)                           # branch 0: conv(s0)
    w1 = fold_t(p1, C_PREV)                                # branch 1: conv(s1)
    w2 = fold_t(p2, C_PREV)                                # branch 3: conv(s1)
    top = jnp.concatenate([w0, w1], axis=2)                # (9, C_OUT, 10)
    bot = jnp.concatenate(
        [jnp.zeros((9, C_OUT, C_PREV_PREV), jnp.float32), w2], axis=2)
    w_all = jnp.concatenate([top, bot], axis=1).astype(MXU_DTYPE)   # (9, 8, 10)
    b_all = jnp.concatenate([p0['beta'] + p1['beta'],
                             p2['beta']]).reshape(STEPS * C_OUT, 1)  # (8, 1) fp32
    return {'w': w_all, 'b': b_all}


# ----------------------------- JAX glue ------------------------------------
def scale_dimension(dim, scale):
    return int((float(dim) - 1.0) * scale + 1.0) if dim % 2 == 1 else int(float(dim) * scale)


def _nearest_resize_nchw(x, out_h, out_w):
    """PyTorch F.interpolate(mode='nearest') semantics: src = floor(dst*in/out)."""
    N, C, H, W = x.shape
    hi = (np.arange(out_h) * H // out_h).astype(np.int32)
    wi = (np.arange(out_w) * W // out_w).astype(np.int32)
    return x[:, :, hi][:, :, :, wi]


def cell_forward(prev_prev_input, prev_input, fused_params,
                 is_first=True, mem_output=False, mem_state=None):
    """Mirror of Cell.forward (NCHW in / NCHW out). The whole cell is ONE
    Pallas call; only the (tiny) channel concat and reshapes run in XLA."""
    s0, s1 = prev_prev_input, prev_input
    if DOWNUP_SAMPLE != 0:
        scale = 0.5 if DOWNUP_SAMPLE == -1 else 2.0
        fh = scale_dimension(s1.shape[2], scale)
        fw = scale_dimension(s1.shape[3], scale)
        s1 = _nearest_resize_nchw(s1, fh, fw)
    if s0.shape[2] != s1.shape[2] or s0.shape[3] != s1.shape[3]:
        s0 = _nearest_resize_nchw(s0, s1.shape[2], s1.shape[3])

    N, _, H, W = s1.shape
    HW = H * W
    rows = STEPS * C_OUT

    # NCHW -> (N, C, H*W): free reshapes; channels on sublanes, H*W on lanes.
    x_cat = jnp.concatenate([s0.reshape(N, C_PREV_PREV, HW),
                             s1.reshape(N, C_PREV, HW)], axis=1)      # (N, 10, HW)
    ct = x_cat.shape[1]
    w_all, b_all = fused_params['w'], fused_params['b']
    masks = _build_shift_masks(H, W)                                  # (9, 1, HW)

    has_mem_in = (not is_first) and (mem_state is not None) and (not mem_output)
    kernel = _make_cell_kernel(H, W, has_mem_in, mem_output)

    inputs = [x_cat, w_all, b_all, masks]
    in_specs = [
        pl.BlockSpec((1, ct, HW), lambda n: (n, 0, 0)),
        pl.BlockSpec((9, rows, ct), lambda n: (0, 0, 0)),
        pl.BlockSpec((rows, 1), lambda n: (0, 0)),
        pl.BlockSpec((9, 1, HW), lambda n: (0, 0, 0)),
    ]
    if has_mem_in:
        inputs.append(mem_state.reshape(N, rows, HW))
        in_specs.append(pl.BlockSpec((1, rows, HW), lambda n: (n, 0, 0)))

    out_spec = pl.BlockSpec((1, rows, HW), lambda n: (n, 0, 0))
    if mem_output:
        out_shape = jax.ShapeDtypeStruct((N, rows, HW), jnp.float32)
        out_specs = out_spec
    else:
        out_shape = (jax.ShapeDtypeStruct((N, rows, HW), jnp.float32),
                     jax.ShapeDtypeStruct((N, rows, HW), jnp.float32))
        out_specs = (out_spec, out_spec)

    result = pl.pallas_call(
        kernel,
        out_shape=out_shape,
        grid=(N,),
        in_specs=in_specs,
        out_specs=out_specs,
        compiler_params=pltpu.CompilerParams(
            dimension_semantics=("parallel",)),   # batch shards across v7x's 2 TCs
    )(*inputs)

    spikes = result if mem_output else result[0]
    # rows 0:C_OUT = step-0 state, C_OUT:2*C_OUT = step-1 state
    # == torch.cat(states[-block_multiplier:], dim=1) in NCHW.
    concat_nchw = spikes.reshape(N, rows, H, W)
    # (Residual membrane state is result[1]; the reference keeps it as module
    #  state and does not return it from forward.)
    return prev_input, concat_nchw


# --------------------------------- main -------------------------------------
if __name__ == "__main__":
    key = jax.random.PRNGKey(0)
    k0, k1, kp = jax.random.split(key, 3)
    N, H, W = 2, 16, 16
    prev_prev = jax.random.normal(k0, (N, C_PREV_PREV, H, W), jnp.float32)
    prev = jax.random.normal(k1, (N, C_PREV, H, W), jnp.float32)

    op_params = init_cell_params(kp)
    fused = fuse_cell_params(op_params)     # fp32 BN fold, bf16 MXU operands

    fwd = jax.jit(lambda a, b: cell_forward(a, b, fused,
                                            is_first=True, mem_output=False))
    out_prev, concat = fwd(prev_prev, prev)
    jax.block_until_ready((out_prev, concat))

    assert out_prev.shape == (N, C_PREV, H, W)
    assert concat.shape == (N, BLOCK_MULTIPLIER * C_OUT, H, W)
    assert bool(jnp.all(jnp.isfinite(concat)))
    print("KERNEL_OK")
</pallas_src>

<mosaic_0001>
module attributes {stable_mosaic.version = 11 : i64} {
  func.func @kernel(%arg0: i32, %arg1: memref<1x10x256xf32, #tpu.memory_space<vmem>>, %arg2: memref<9x8x10xbf16, #tpu.memory_space<vmem>>, %arg3: memref<8x1xf32, #tpu.memory_space<vmem>>, %arg4: memref<9x1x256xf32, #tpu.memory_space<vmem>>, %arg5: memref<1x8x256xf32, #tpu.memory_space<vmem>>, %arg6: memref<1x8x256xf32, #tpu.memory_space<vmem>>) attributes {dimension_semantics = [#tpu.dimension_semantics<parallel>], iteration_bounds = array<i64: 2>, scalar_prefetch = 0 : i64, scratch_operands = 0 : i64, tpu.core_type = #tpu.core_type<tc>, window_params = [{transform_indices = @transform_0, window_bounds = array<i64: 1, 10, 256>}, {pipeline_mode = #tpu.pipeline_mode<synchronous>, transform_indices = @transform_1, window_bounds = array<i64: 9, 8, 10>}, {pipeline_mode = #tpu.pipeline_mode<synchronous>, transform_indices = @transform_2, window_bounds = array<i64: 8, 1>}, {pipeline_mode = #tpu.pipeline_mode<synchronous>, transform_indices = @transform_3, window_bounds = array<i64: 9, 1, 256>}, {transform_indices = @transform_4, window_bounds = array<i64: 1, 8, 256>}, {transform_indices = @transform_5, window_bounds = array<i64: 1, 8, 256>}]} {
    %c0 = arith.constant 0 : index
    %c0_0 = arith.constant 0 : index
    %c0_1 = arith.constant 0 : index
    %0 = vector.load %arg1[%c0, %c0_0, %c0_1] : memref<1x10x256xf32, #tpu.memory_space<vmem>>, vector<1x10x256xf32>
    %1 = vector.shape_cast %0 : vector<1x10x256xf32> to vector<10x256xf32>
    %cst = arith.constant 0.000000e+00 : f32
    %2 = vector.broadcast %cst : f32 to vector<8x256xf32>
    %c17_i32 = arith.constant 17 : i32
    %3 = tpu.dynamic_rotate %1 by %c17_i32 dim 1 : vector<10x256xf32>, i32 -> vector<10x256xf32>
    %c0_2 = arith.constant 0 : index
    %c0_3 = arith.constant 0 : index
    %c0_4 = arith.constant 0 : index
    %4 = vector.load %arg4[%c0_2, %c0_3, %c0_4] : memref<9x1x256xf32, #tpu.memory_space<vmem>>, vector<1x1x256xf32>
    %5 = vector.shape_cast %4 : vector<1x1x256xf32> to vector<1x256xf32>
    %6 = vector.broadcast %5 : vector<1x256xf32> to vector<10x256xf32>
    %7 = arith.mulf %3, %6 : vector<10x256xf32>
    %8 = arith.truncf %7 : vector<10x256xf32> to vector<10x256xbf16>
    %c0_5 = arith.constant 0 : index
    %c0_6 = arith.constant 0 : index
    %c0_7 = arith.constant 0 : index
    %9 = vector.load %arg2[%c0_5, %c0_6, %c0_7] : memref<9x8x10xbf16, #tpu.memory_space<vmem>>, vector<1x8x10xbf16>
    %10 = vector.shape_cast %9 : vector<1x8x10xbf16> to vector<8x10xbf16>
    %cst_8 = arith.constant dense<0.000000e+00> : vector<8x256xf32>
    %11 = tpu.matmul %10, %8, %cst_8 {dimension_numbers = #tpu.dot_dimension_numbers<[1], [0], [0], [1], [0, 0, 1, 1], [], []>} : vector<8x10xbf16>, vector<10x256xbf16>, vector<8x256xf32> -> vector<8x256xf32>
    %12 = arith.addf %2, %11 : vector<8x256xf32>
    %c16_i32 = arith.constant 16 : i32
    %13 = tpu.dynamic_rotate %1 by %c16_i32 dim 1 : vector<10x256xf32>, i32 -> vector<10x256xf32>
    %c1 = arith.constant 1 : index
    %c0_9 = arith.constant 0 : index
    %c0_10 = arith.constant 0 : index
    %14 = vector.load %arg4[%c1, %c0_9, %c0_10] : memref<9x1x256xf32, #tpu.memory_space<vmem>>, vector<1x1x256xf32>
    %15 = vector.shape_cast %14 : vector<1x1x256xf32> to vector<1x256xf32>
    %16 = vector.broadcast %15 : vector<1x256xf32> to vector<10x256xf32>
    %17 = arith.mulf %13, %16 : vector<10x256xf32>
    %18 = arith.truncf %17 : vector<10x256xf32> to vector<10x256xbf16>
    %c1_11 = arith.constant 1 : index
    %c0_12 = arith.constant 0 : index
    %c0_13 = arith.constant 0 : index
    %19 = vector.load %arg2[%c1_11, %c0_12, %c0_13] : memref<9x8x10xbf16, #tpu.memory_space<vmem>>, vector<1x8x10xbf16>
    %20 = vector.shape_cast %19 : vector<1x8x10xbf16> to vector<8x10xbf16>
    %cst_14 = arith.constant dense<0.000000e+00> : vector<8x256xf32>
    %21 = tpu.matmul %20, %18, %cst_14 {dimension_numbers = #tpu.dot_dimension_numbers<[1], [0], [0], [1], [0, 0, 1, 1], [], []>} : vector<8x10xbf16>, vector<10x256xbf16>, vector<8x256xf32> -> vector<8x256xf32>
    %22 = arith.addf %12, %21 : vector<8x256xf32>
    %c15_i32 = arith.constant 15 : i32
    %23 = tpu.dynamic_rotate %1 by %c15_i32 dim 1 : vector<10x256xf32>, i32 -> vector<10x256xf32>
    %c2 = arith.constant 2 : index
    %c0_15 = arith.constant 0 : index
    %c0_16 = arith.constant 0 : index
    %24 = vector.load %arg4[%c2, %c0_15, %c0_16] : memref<9x1x256xf32, #tpu.memory_space<vmem>>, vector<1x1x256xf32>
    %25 = vector.shape_cast %24 : vector<1x1x256xf32> to vector<1x256xf32>
    %26 = vector.broadcast %25 : vector<1x256xf32> to vector<10x256xf32>
    %27 = arith.mulf %23, %26 : vector<10x256xf32>
    %28 = arith.truncf %27 : vector<10x256xf32> to vector<10x256xbf16>
    %c2_17 = arith.constant 2 : index
    %c0_18 = arith.constant 0 : index
    %c0_19 = arith.constant 0 : index
    %29 = vector.load %arg2[%c2_17, %c0_18, %c0_19] : memref<9x8x10xbf16, #tpu.memory_space<vmem>>, vector<1x8x10xbf16>
    %30 = vector.shape_cast %29 : vector<1x8x10xbf16> to vector<8x10xbf16>
    %cst_20 = arith.constant dense<0.000000e+00> : vector<8x256xf32>
    %31 = tpu.matmul %30, %28, %cst_20 {dimension_numbers = #tpu.dot_dimension_numbers<[1], [0], [0], [1], [0, 0, 1, 1], [], []>} : vector<8x10xbf16>, vector<10x256xbf16>, vector<8x256xf32> -> vector<8x256xf32>
    %32 = arith.addf %22, %31 : vector<8x256xf32>
    %c1_i32 = arith.constant 1 : i32
    %33 = tpu.dynamic_rotate %1 by %c1_i32 dim 1 : vector<10x256xf32>, i32 -> vector<10x256xf32>
    %c3 = arith.constant 3 : index
    %c0_21 = arith.constant 0 : index
    %c0_22 = arith.constant 0 : index
    %34 = vector.load %arg4[%c3, %c0_21, %c0_22] : memref<9x1x256xf32, #tpu.memory_space<vmem>>, vector<1x1x256xf32>
    %35 = vector.shape_cast %34 : vector<1x1x256xf32> to vector<1x256xf32>
    %36 = vector.broadcast %35 : vector<1x256xf32> to vector<10x256xf32>
    %37 = arith.mulf %33, %36 : vector<10x256xf32>
    %38 = arith.truncf %37 : vector<10x256xf32> to vector<10x256xbf16>
    %c3_23 = arith.constant 3 : index
    %c0_24 = arith.constant 0 : index
    %c0_25 = arith.constant 0 : index
    %39 = vector.load %arg2[%c3_23, %c0_24, %c0_25] : memref<9x8x10xbf16, #tpu.memory_space<vmem>>, vector<1x8x10xbf16>
    %40 = vector.shape_cast %39 : vector<1x8x10xbf16> to vector<8x10xbf16>
    %cst_26 = arith.constant dense<0.000000e+00> : vector<8x256xf32>
    %41 = tpu.matmul %40, %38, %cst_26 {dimension_numbers = #tpu.dot_dimension_numbers<[1], [0], [0], [1], [0, 0, 1, 1], [], []>} : vector<8x10xbf16>, vector<10x256xbf16>, vector<8x256xf32> -> vector<8x256xf32>
    %42 = arith.addf %32, %41 : vector<8x256xf32>
    %c4 = arith.constant 4 : index
    %c0_27 = arith.constant 0 : index
    %c0_28 = arith.constant 0 : index
    %43 = vector.load %arg4[%c4, %c0_27, %c0_28] : memref<9x1x256xf32, #tpu.memory_space<vmem>>, vector<1x1x256xf32>
    %44 = vector.shape_cast %43 : vector<1x1x256xf32> to vector<1x256xf32>
    %45 = vector.broadcast %44 : vector<1x256xf32> to vector<10x256xf32>
    %46 = arith.mulf %1, %45 : vector<10x256xf32>
    %47 = arith.truncf %46 : vector<10x256xf32> to vector<10x256xbf16>
    %c4_29 = arith.constant 4 : index
    %c0_30 = arith.constant 0 : index
    %c0_31 = arith.constant 0 : index
    %48 = vector.load %arg2[%c4_29, %c0_30, %c0_31] : memref<9x8x10xbf16, #tpu.memory_space<vmem>>, vector<1x8x10xbf16>
    %49 = vector.shape_cast %48 : vector<1x8x10xbf16> to vector<8x10xbf16>
    %cst_32 = arith.constant dense<0.000000e+00> : vector<8x256xf32>
    %50 = tpu.matmul %49, %47, %cst_32 {dimension_numbers = #tpu.dot_dimension_numbers<[1], [0], [0], [1], [0, 0, 1, 1], [], []>} : vector<8x10xbf16>, vector<10x256xbf16>, vector<8x256xf32> -> vector<8x256xf32>
    %51 = arith.addf %42, %50 : vector<8x256xf32>
    %c255_i32 = arith.constant 255 : i32
    %52 = tpu.dynamic_rotate %1 by %c255_i32 dim 1 : vector<10x256xf32>, i32 -> vector<10x256xf32>
    %c5 = arith.constant 5 : index
    %c0_33 = arith.constant 0 : index
    %c0_34 = arith.constant 0 : index
    %53 = vector.load %arg4[%c5, %c0_33, %c0_34] : memref<9x1x256xf32, #tpu.memory_space<vmem>>, vector<1x1x256xf32>
    %54 = vector.shape_cast %53 : vector<1x1x256xf32> to vector<1x256xf32>
    %55 = vector.broadcast %54 : vector<1x256xf32> to vector<10x256xf32>
    %56 = arith.mulf %52, %55 : vector<10x256xf32>
    %57 = arith.truncf %56 : vector<10x256xf32> to vector<10x256xbf16>
    %c5_35 = arith.constant 5 : index
    %c0_36 = arith.constant 0 : index
    %c0_37 = arith.constant 0 : index
    %58 = vector.load %arg2[%c5_35, %c0_36, %c0_37] : memref<9x8x10xbf16, #tpu.memory_space<vmem>>, vector<1x8x10xbf16>
    %59 = vector.shape_cast %58 : vector<1x8x10xbf16> to vector<8x10xbf16>
    %cst_38 = arith.constant dense<0.000000e+00> : vector<8x256xf32>
    %60 = tpu.matmul %59, %57, %cst_38 {dimension_numbers = #tpu.dot_dimension_numbers<[1], [0], [0], [1], [0, 0, 1, 1], [], []>} : vector<8x10xbf16>, vector<10x256xbf16>, vector<8x256xf32> -> vector<8x256xf32>
    %61 = arith.addf %51, %60 : vector<8x256xf32>
    %c241_i32 = arith.constant 241 : i32
    %62 = tpu.dynamic_rotate %1 by %c241_i32 dim 1 : vector<10x256xf32>, i32 -> vector<10x256xf32>
    %c6 = arith.constant 6 : index
    %c0_39 = arith.constant 0 : index
    %c0_40 = arith.constant 0 : index
    %63 = vector.load %arg4[%c6, %c0_39, %c0_40] : memref<9x1x256xf32, #tpu.memory_space<vmem>>, vector<1x1x256xf32>
    %64 = vector.shape_cast %63 : vector<1x1x256xf32> to vector<1x256xf32>
    %65 = vector.broadcast %64 : vector<1x256xf32> to vector<10x256xf32>
    %66 = arith.mulf %62, %65 : vector<10x256xf32>
    %67 = arith.truncf %66 : vector<10x256xf32> to vector<10x256xbf16>
    %c6_41 = arith.constant 6 : index
    %c0_42 = arith.constant 0 : index
    %c0_43 = arith.constant 0 : index
    %68 = vector.load %arg2[%c6_41, %c0_42, %c0_43] : memref<9x8x10xbf16, #tpu.memory_space<vmem>>, vector<1x8x10xbf16>
    %69 = vector.shape_cast %68 : vector<1x8x10xbf16> to vector<8x10xbf16>
    %cst_44 = arith.constant dense<0.000000e+00> : vector<8x256xf32>
    %70 = tpu.matmul %69, %67, %cst_44 {dimension_numbers = #tpu.dot_dimension_numbers<[1], [0], [0], [1], [0, 0, 1, 1], [], []>} : vector<8x10xbf16>, vector<10x256xbf16>, vector<8x256xf32> -> vector<8x256xf32>
    %71 = arith.addf %61, %70 : vector<8x256xf32>
    %c240_i32 = arith.constant 240 : i32
    %72 = tpu.dynamic_rotate %1 by %c240_i32 dim 1 : vector<10x256xf32>, i32 -> vector<10x256xf32>
    %c7 = arith.constant 7 : index
    %c0_45 = arith.constant 0 : index
    %c0_46 = arith.constant 0 : index
    %73 = vector.load %arg4[%c7, %c0_45, %c0_46] : memref<9x1x256xf32, #tpu.memory_space<vmem>>, vector<1x1x256xf32>
    %74 = vector.shape_cast %73 : vector<1x1x256xf32> to vector<1x256xf32>
    %75 = vector.broadcast %74 : vector<1x256xf32> to vector<10x256xf32>
    %76 = arith.mulf %72, %75 : vector<10x256xf32>
    %77 = arith.truncf %76 : vector<10x256xf32> to vector<10x256xbf16>
    %c7_47 = arith.constant 7 : index
    %c0_48 = arith.constant 0 : index
    %c0_49 = arith.constant 0 : index
    %78 = vector.load %arg2[%c7_47, %c0_48, %c0_49] : memref<9x8x10xbf16, #tpu.memory_space<vmem>>, vector<1x8x10xbf16>
    %79 = vector.shape_cast %78 : vector<1x8x10xbf16> to vector<8x10xbf16>
    %cst_50 = arith.constant dense<0.000000e+00> : vector<8x256xf32>
    %80 = tpu.matmul %79, %77, %cst_50 {dimension_numbers = #tpu.dot_dimension_numbers<[1], [0], [0], [1], [0, 0, 1, 1], [], []>} : vector<8x10xbf16>, vector<10x256xbf16>, vector<8x256xf32> -> vector<8x256xf32>
    %81 = arith.addf %71, %80 : vector<8x256xf32>
    %c239_i32 = arith.constant 239 : i32
    %82 = tpu.dynamic_rotate %1 by %c239_i32 dim 1 : vector<10x256xf32>, i32 -> vector<10x256xf32>
    %c8 = arith.constant 8 : index
    %c0_51 = arith.constant 0 : index
    %c0_52 = arith.constant 0 : index
    %83 = vector.load %arg4[%c8, %c0_51, %c0_52] : memref<9x1x256xf32, #tpu.memory_space<vmem>>, vector<1x1x256xf32>
    %84 = vector.shape_cast %83 : vector<1x1x256xf32> to vector<1x256xf32>
    %85 = vector.broadcast %84 : vector<1x256xf32> to vector<10x256xf32>
    %86 = arith.mulf %82, %85 : vector<10x256xf32>
    %87 = arith.truncf %86 : vector<10x256xf32> to vector<10x256xbf16>
    %c8_53 = arith.constant 8 : index
    %c0_54 = arith.constant 0 : index
    %c0_55 = arith.constant 0 : index
    %88 = vector.load %arg2[%c8_53, %c0_54, %c0_55] : memref<9x8x10xbf16, #tpu.memory_space<vmem>>, vector<1x8x10xbf16>
    %89 = vector.shape_cast %88 : vector<1x8x10xbf16> to vector<8x10xbf16>
    %cst_56 = arith.constant dense<0.000000e+00> : vector<8x256xf32>
    %90 = tpu.matmul %89, %87, %cst_56 {dimension_numbers = #tpu.dot_dimension_numbers<[1], [0], [0], [1], [0, 0, 1, 1], [], []>} : vector<8x10xbf16>, vector<10x256xbf16>, vector<8x256xf32> -> vector<8x256xf32>
    %91 = arith.addf %81, %90 : vector<8x256xf32>
    %c0_57 = arith.constant 0 : index
    %c0_58 = arith.constant 0 : index
    %92 = vector.load %arg3[%c0_57, %c0_58] : memref<8x1xf32, #tpu.memory_space<vmem>>, vector<8x1xf32>
    %93 = vector.broadcast %92 : vector<8x1xf32> to vector<8x256xf32>
    %94 = arith.addf %91, %93 : vector<8x256xf32>
    %95 = vector.extract_strided_slice %94 {offsets = [0, 0], sizes = [4, 256], strides = [1, 1]} : vector<8x256xf32> to vector<4x256xf32>
    %cst_59 = arith.constant 0.000000e+00 : f32
    %96 = vector.broadcast %cst_59 : f32 to vector<4x256xf32>
    %97 = arith.cmpf ogt, %95, %96 : vector<4x256xf32>
    %98 = arith.extui %97 : vector<4x256xi1> to vector<4x256xi32>
    %99 = arith.sitofp %98 : vector<4x256xi32> to vector<4x256xf32>
    %100 = vector.extract_strided_slice %94 {offsets = [4, 0], sizes = [4, 256], strides = [1, 1]} : vector<8x256xf32> to vector<4x256xf32>
    %101 = arith.addf %100, %99 : vector<4x256xf32>
    %cst_60 = arith.constant 0.000000e+00 : f32
    %102 = vector.broadcast %cst_60 : f32 to vector<4x256xf32>
    %103 = arith.cmpf ogt, %101, %102 : vector<4x256xf32>
    %104 = arith.extui %103 : vector<4x256xi1> to vector<4x256xi32>
    %105 = arith.sitofp %104 : vector<4x256xi32> to vector<4x256xf32>
    %c0_61 = arith.constant 0 : index
    %c0_62 = arith.constant 0 : index
    %c0_63 = arith.constant 0 : index
    %106 = vector.load %arg5[%c0_61, %c0_62, %c0_63] : memref<1x8x256xf32, #tpu.memory_space<vmem>>, vector<1x4x256xf32>
    %107 = vector.shape_cast %106 : vector<1x4x256xf32> to vector<4x256xf32>
    %108 = vector.shape_cast %99 : vector<4x256xf32> to vector<1x4x256xf32>
    tpu.vector_store %arg5[%c0_61, %c0_62, %c0_63], %108 {strides = array<i32>} : memref<1x8x256xf32, #tpu.memory_space<vmem>>, vector<1x4x256xf32>,
    %c0_64 = arith.constant 0 : index
    %c4_65 = arith.constant 4 : index
    %c0_66 = arith.constant 0 : index
    %109 = vector.load %arg5[%c0_64, %c4_65, %c0_66] : memref<1x8x256xf32, #tpu.memory_space<vmem>>, vector<1x4x256xf32>
    %110 = vector.shape_cast %109 : vector<1x4x256xf32> to vector<4x256xf32>
    %111 = vector.shape_cast %105 : vector<4x256xf32> to vector<1x4x256xf32>
    tpu.vector_store %arg5[%c0_64, %c4_65, %c0_66], %111 {strides = array<i32>} : memref<1x8x256xf32, #tpu.memory_space<vmem>>, vector<1x4x256xf32>,
    %cst_67 = arith.constant 2.000000e-01 : f32
    %112 = vector.broadcast %cst_67 : f32 to vector<4x256xf32>
    %113 = arith.mulf %95, %112 : vector<4x256xf32>
    %cst_68 = arith.constant 1.000000e+00 : f32
    %114 = vector.broadcast %cst_68 : f32 to vector<4x256xf32>
    %115 = arith.subf %114, %99 : vector<4x256xf32>
    %116 = arith.mulf %113, %115 : vector<4x256xf32>
    %c0_69 = arith.constant 0 : index
    %c0_70 = arith.constant 0 : index
    %c0_71 = arith.constant 0 : index
    %117 = vector.load %arg6[%c0_69, %c0_70, %c0_71] : memref<1x8x256xf32, #tpu.memory_space<vmem>>, vector<1x4x256xf32>
    %118 = vector.shape_cast %117 : vector<1x4x256xf32> to vector<4x256xf32>
    %119 = vector.shape_cast %116 : vector<4x256xf32> to vector<1x4x256xf32>
    tpu.vector_store %arg6[%c0_69, %c0_70, %c0_71], %119 {strides = array<i32>} : memref<1x8x256xf32, #tpu.memory_space<vmem>>, vector<1x4x256xf32>,
    %cst_72 = arith.constant 2.000000e-01 : f32
    %120 = vector.broadcast %cst_72 : f32 to vector<4x256xf32>
    %121 = arith.mulf %101, %120 : vector<4x256xf32>
    %cst_73 = arith.constant 1.000000e+00 : f32
    %122 = vector.broadcast %cst_73 : f32 to vector<4x256xf32>
    %123 = arith.subf %122, %105 : vector<4x256xf32>
    %124 = arith.mulf %121, %123 : vector<4x256xf32>
    %c0_74 = arith.constant 0 : index
    %c4_75 = arith.constant 4 : index
    %c0_76 = arith.constant 0 : index
    %125 = vector.load %arg6[%c0_74, %c4_75, %c0_76] : memref<1x8x256xf32, #tpu.memory_space<vmem>>, vector<1x4x256xf32>
    %126 = vector.shape_cast %125 : vector<1x4x256xf32> to vector<4x256xf32>
    %127 = vector.shape_cast %124 : vector<4x256xf32> to vector<1x4x256xf32>
    tpu.vector_store %arg6[%c0_74, %c4_75, %c0_76], %127 {strides = array<i32>} : memref<1x8x256xf32, #tpu.memory_space<vmem>>, vector<1x4x256xf32>,
    return
  }
  func.func @transform_0(%arg0: i32) -> (i32, i32, i32) {
    %c0_i32 = arith.constant 0 : i32
    %c0_i32_0 = arith.constant 0 : i32
    %c0_i32_1 = arith.constant 0 : i32
    return %arg0, %c0_i32, %c0_i32_0 : i32, i32, i32
  }
  func.func @transform_1(%arg0: i32) -> (i32, i32, i32) {
    %c0_i32 = arith.constant 0 : i32
    %c0_i32_0 = arith.constant 0 : i32
    %c0_i32_1 = arith.constant 0 : i32
    %c0_i32_2 = arith.constant 0 : i32
    return %c0_i32, %c0_i32_0, %c0_i32_1 : i32, i32, i32
  }
  func.func @transform_2(%arg0: i32) -> (i32, i32) {
    %c0_i32 = arith.constant 0 : i32
    %c0_i32_0 = arith.constant 0 : i32
    %c0_i32_1 = arith.constant 0 : i32
    return %c0_i32, %c0_i32_0 : i32, i32
  }
  func.func @transform_3(%arg0: i32) -> (i32, i32, i32) {
    %c0_i32 = arith.constant 0 : i32
    %c0_i32_0 = arith.constant 0 : i32
    %c0_i32_1 = arith.constant 0 : i32
    %c0_i32_2 = arith.constant 0 : i32
    return %c0_i32, %c0_i32_0, %c0_i32_1 : i32, i32, i32
  }
  func.func @transform_4(%arg0: i32) -> (i32, i32, i32) {
    %c0_i32 = arith.constant 0 : i32
    %c0_i32_0 = arith.constant 0 : i32
    %c0_i32_1 = arith.constant 0 : i32
    return %arg0, %c0_i32, %c0_i32_0 : i32, i32, i32
  }
  func.func @transform_5(%arg0: i32) -> (i32, i32, i32) {
    %c0_i32 = arith.constant 0 : i32
    %c0_i32_0 = arith.constant 0 : i32
    %c0_i32_1 = arith.constant 0 : i32
    return %arg0, %c0_i32, %c0_i32_0 : i32, i32, i32
  }
}

</mosaic_0001>

<llo_original>
// kernel: _lambda_.1
$region0: #{_lambda_.1}
  #allocation0 [shape = 'u32[]', space=smem, size = 0x4, offset = 0x4, fixed_abs, tag = 'smem constant byte address 0x4 - core index']
  #allocation1 [shape = 'u32[144,128]{1,0:T(1,128)}', space=vmem, size = 0x12000, scoped, tag = 'internal scratch']
  %s0 = inlined_call_operand.vmem [shape: f32[2,10,256], index: 0, kind: input, shape index: {}]
  %s1 = inlined_call_operand.vmem [shape: bf16[9,8,10], index: 1, kind: input, shape index: {}]
  %s2 = inlined_call_operand.vmem [shape: f32[8,1], index: 2, kind: input, shape index: {}]
  %s3 = inlined_call_operand.vmem [shape: f32[9,1,256], index: 3, kind: input, shape index: {}]
  %s4 = inlined_call_operand.vmem [shape: f32[2,8,256], index: 4, kind: output, shape index: {0}]
  %s5 = inlined_call_operand.hbm [shape: f32[2,8,256], index: 5, kind: output, shape index: {1}]
  %6 = xla_tuple %s4, %s5
  %s7 = sld [smem:[#allocation0]]
  $region57: #{_lambda_.1} parent=0
    _
  %s9 = ssub.s32 1, %s7
  %s10 = scalar_select 0, %s9, %s7
  $region1: #{_lambda_.1} parent=0
    #allocation2 [shape = 'u8[16384]{0}', space=vmem, size = 0x4000, scoped, tag = 'output window, operand 1']
    #allocation3 [shape = 's32[2]{0}', space=sflag, size = 0x8, scoped, tag = 'scoped memory for _lambda_.1']
    %11 = vsyncpa [#allocation3], 0
    %s12 = scalar_lea.sflag [#allocation3], 1
    %13 = vsyncpa %s12, 0
    loop: start=0, step=1, limit=4
    $region2: #{_lambda_.1} parent=1 // loop_pre_header
      _
    $region3: #{_lambda_.1} parent=1 // loop_header
      %s15 = sphi 0, %s19
      %p16 = scmp.ge.s32.totalorder %s15, 4
      %s25 = sphi 0, %s27
      %s28 = sphi 0, %s25
      %s29 = sphi 0, %s28
      %s45 = sphi 0, %s29
      %s49 = sphi 0, %s49
      %s51 = sphi 0, %s49
      %s52 = sphi 0, %s51
      %s66 = sphi 0, %s52
      %s70 = sphi 0, %s70
      %s72 = sphi 0, %s70
      %s73 = sphi 0, %s72
      %s87 = sphi 0, %s73
      %s91 = sphi 0, %s91
      %s93 = sphi 0, %s91
      %s94 = sphi 0, %s93
      %s108 = sphi 0, %s94
      %s114 = sphi 0, %s116
      %s117 = sphi 0, %s114
      %s118 = sphi 0, %s117
      %s134 = sphi 0, %s118
      %s140 = sphi 0, %s142
      %s143 = sphi 0, %s140
      %s144 = sphi 0, %s143
      %s160 = sphi 0, %s144
    $region4: #{_lambda_.1} parent=1 // loop_header_branch
      %18 = sbr.rel (%p16) target = $region8
    $region5: #{_lambda_.1} parent=1 // loop_body
      %s20 = ssub.s32 %s15, 1
      %s21 = ssub.s32 %s15, 2
      %s22 = sadd.s32 %s15, 1
      %s23 = ssub.s32 %s15, %s22
      %p24 = scmp.eq.s32.totalorder %s23, 0
      %s26 = sadd.s32 %s25, 1
      %s27 = scalar_select %p24, %s25, %s26
      %p30 = pneg %p24
      %p31 = scmp.eq.s32.totalorder %s15, 1
      %p32 = por %p30, %p31
      %p33 = scmp.ne.s32.totalorder %s25, %s28
      %p34 = scmp.eq.s32.totalorder %s15, 0
      %p35 = por %p33, %p34
      %p36 = scmp.ne.s32.totalorder %s25, %s28
      %p37 = scmp.eq.s32.totalorder %s20, 1
      %p38 = por %p36, %p37
      %p39 = scmp.ne.s32.totalorder %s28, %s29
      %p40 = scmp.eq.s32.totalorder %s20, 0
      %p41 = por %p39, %p40
      %p42 = scmp.ne.s32.totalorder %s28, %s29
      %p43 = scmp.eq.s32.totalorder %s21, 1
      %p44 = por %p42, %p43
      %p46 = scmp.ne.s32.totalorder %s29, %s45
      %p47 = scmp.eq.s32.totalorder %s21, 0
      %p48 = por %p46, %p47
      %s50 = sadd.s32 %s49, 1
      %p53 = scmp.eq.s32.totalorder %s15, 1
      %p54 = scmp.ne.s32.totalorder %s49, %s51
      %p55 = scmp.eq.s32.totalorder %s15, 0
      %p56 = por %p54, %p55
      %p57 = scmp.ne.s32.totalorder %s49, %s51
      %p58 = scmp.eq.s32.totalorder %s20, 1
      %p59 = por %p57, %p58
      %p60 = scmp.ne.s32.totalorder %s51, %s52
      %p61 = scmp.eq.s32.totalorder %s20, 0
      %p62 = por %p60, %p61
      %p63 = scmp.ne.s32.totalorder %s51, %s52
      %p64 = scmp.eq.s32.totalorder %s21, 1
      %p65 = por %p63, %p64
      %p67 = scmp.ne.s32.totalorder %s52, %s66
      %p68 = scmp.eq.s32.totalorder %s21, 0
      %p69 = por %p67, %p68
      %s71 = sadd.s32 %s70, 1
      %p74 = scmp.eq.s32.totalorder %s15, 1
      %p75 = scmp.ne.s32.totalorder %s70, %s72
      %p76 = scmp.eq.s32.totalorder %s15, 0
      %p77 = por %p75, %p76
      %p78 = scmp.ne.s32.totalorder %s70, %s72
      %p79 = scmp.eq.s32.totalorder %s20, 1
      %p80 = por %p78, %p79
      %p81 = scmp.ne.s32.totalorder %s72, %s73
      %p82 = scmp.eq.s32.totalorder %s20, 0
      %p83 = por %p81, %p82
      %p84 = scmp.ne.s32.totalorder %s72, %s73
      %p85 = scmp.eq.s32.totalorder %s21, 1
      %p86 = por %p84, %p85
      %p88 = scmp.ne.s32.totalorder %s73, %s87
      %p89 = scmp.eq.s32.totalorder %s21, 0
      %p90 = por %p88, %p89
      %s92 = sadd.s32 %s91, 1
      %p95 = scmp.eq.s32.totalorder %s15, 1
      %p96 = scmp.ne.s32.totalorder %s91, %s93
      %p97 = scmp.eq.s32.totalorder %s15, 0
      %p98 = por %p96, %p97
      %p99 = scmp.ne.s32.totalorder %s91, %s93
      %p100 = scmp.eq.s32.totalorder %s20, 1
      %p101 = por %p99, %p100
      %p102 = scmp.ne.s32.totalorder %s93, %s94
      %p103 = scmp.eq.s32.totalorder %s20, 0
      %p104 = por %p102, %p103
      %p105 = scmp.ne.s32.totalorder %s93, %s94
      %p106 = scmp.eq.s32.totalorder %s21, 1
      %p107 = por %p105, %p106
      %p109 = scmp.ne.s32.totalorder %s94, %s108
      %p110 = scmp.eq.s32.totalorder %s21, 0
      %p111 = por %p109, %p110
      %s112 = ssub.s32 %s15, %s22
      %p113 = scmp.eq.s32.totalorder %s112, 0
      %s115 = sadd.s32 %s114, 1
      %s116 = scalar_select %p113, %s114, %s115
      %p119 = pneg %p113
      %p120 = scmp.eq.s32.totalorder %s15, 1
      %p121 = por %p119, %p120
      %p122 = scmp.ne.s32.totalorder %s114, %s117
      %p123 = scmp.eq.s32.totalorder %s15, 0
      %p124 = por %p122, %p123
      %p125 = scmp.ne.s32.totalorder %s114, %s117
      %p126 = scmp.eq.s32.totalorder %s20, 1
      %p127 = por %p125, %p126
      %p128 = scmp.ne.s32.totalorder %s117, %s118
      %p129 = scmp.eq.s32.totalorder %s20, 0
      %p130 = por %p128, %p129
      %p131 = scmp.ne.s32.totalorder %s117, %s118
      %p132 = scmp.eq.s32.totalorder %s21, 1
      %p133 = por %p131, %p132
      %p135 = scmp.ne.s32.totalorder %s118, %s134
      %p136 = scmp.eq.s32.totalorder %s21, 0
      %p137 = por %p135, %p136
      %s138 = ssub.s32 %s15, %s22
      %p139 = scmp.eq.s32.totalorder %s138, 0
      %s141 = sadd.s32 %s140, 1
      %s142 = scalar_select %p139, %s140, %s141
      %p145 = pneg %p139
      %p146 = scmp.eq.s32.totalorder %s15, 1
      %p147 = por %p145, %p146
      %p148 = scmp.ne.s32.totalorder %s140, %s143
      %p149 = scmp.eq.s32.totalorder %s15, 0
      %p150 = por %p148, %p149
      %p151 = scmp.ne.s32.totalorder %s140, %s143
      %p152 = scmp.eq.s32.totalorder %s20, 1
      %p153 = por %p151, %p152
      %p154 = scmp.ne.s32.totalorder %s143, %s144
      %p155 = scmp.eq.s32.totalorder %s20, 0
      %p156 = por %p154, %p155
      %p157 = scmp.ne.s32.totalorder %s143, %s144
      %p158 = scmp.eq.s32.totalorder %s21, 1
      %p159 = por %p157, %p158
      %p161 = scmp.ne.s32.totalorder %s144, %s160
      %p162 = scmp.eq.s32.totalorder %s21, 0
      %p163 = por %p161, %p162
      %p164 = scmp.le.s32.totalorder 1, %s15
      %p165 = scmp.lt.s32.totalorder %s15, 3
      %p166 = pnand %p164, %p165
      %p167 = pneg %p166
      // Predicated region
      $region9: #{_lambda_.1} parent=5 // pred_check
        _
      $region10: #{_lambda_.1} parent=5 // pred_check_branch
        %169 = sbr.rel (%p166) target = $region12
      $region11: #{_lambda_.1} parent=5 // pred_region
        %s170 = ssub.s32 %s15, 1
        // Predicated region
        $region13: #{_lambda_.1} parent=11 // pred_check
          %p171 = pneg %p62
        $region14: #{_lambda_.1} parent=11 // pred_check_branch
          %173 = sbr.rel (%p171) target = $region16
        $region15: #{_lambda_.1} parent=11 // pred_region
          _
        $region16: #{_lambda_.1} parent=11 // pred_fallthru
          _
        // Predicated region
        $region17: #{_lambda_.1} parent=11 // pred_check
          %p174 = pneg %p83
        $region18: #{_lambda_.1} parent=11 // pred_check_branch
          %176 = sbr.rel (%p174) target = $region20
        $region19: #{_lambda_.1} parent=11 // pred_region
          _
        $region20: #{_lambda_.1} parent=11 // pred_fallthru
          _
        // Predicated region
        $region21: #{_lambda_.1} parent=11 // pred_check
          %p177 = pneg %p104
        $region22: #{_lambda_.1} parent=11 // pred_check_branch
          %179 = sbr.rel (%p177) target = $region24
        $region23: #{_lambda_.1} parent=11 // pred_region
          _
        $region24: #{_lambda_.1} parent=11 // pred_fallthru
          _
      $region12: #{_lambda_.1} parent=5 // pred_fallthru
        _
      %p180 = scmp.lt.s32.totalorder %s15, 2
      // Predicated region
      $region25: #{_lambda_.1} parent=5 // pred_check
        %p181 = pneg %p180
      $region26: #{_lambda_.1} parent=5 // pred_check_branch
        %183 = sbr.rel (%p181) target = $region28
      $region27: #{_lambda_.1} parent=5 // pred_region
        // Predicated region
        $region29: #{_lambda_.1} parent=27 // pred_check
          %p184 = pneg %p35
        $region30: #{_lambda_.1} parent=27 // pred_check_branch
          %186 = sbr.rel (%p184) target = $region32
        $region31: #{_lambda_.1} parent=27 // pred_region
          %p187 = scmp.lt.s32.totalorder %s15, 1
          %s188 = scalar_select %p187, %s15, 1
          %s189 = smul.addr %s188, 4
          %s190 = smul.addr %s189, 8
          %s191 = scalar_lea.vmem %s0, %s190
        $region32: #{_lambda_.1} parent=27 // pred_fallthru
          _
      $region28: #{_lambda_.1} parent=5 // pred_fallthru
        _
      %p192 = scmp.le.s32.totalorder 1, %s15
      %p193 = scmp.lt.s32.totalorder %s15, 3
      %p194 = pnand %p192, %p193
      %p195 = pneg %p194
      // Predicated region
      $region33: #{_lambda_.1} parent=5 // pred_check
        _
      $region34: #{_lambda_.1} parent=5 // pred_check_branch
        %197 = sbr.rel (%p194) target = $region36
      $region35: #{_lambda_.1} parent=5 // pred_region
        %s198 = ssub.s32 %s15, 1
        %p199 = scmp.lt.s32.totalorder %s20, 1
        %s200 = scalar_select %p199, %s20, 1
        %s201 = smul.addr %s200, 4
        %s202 = smul.addr %s201, 8
        %s203 = scalar_lea.vmem %s0, %s202
        %p204 = pneg %p41
        %p205 = pneg %p38
        %p206 = pneg %p62
        %p207 = pneg %p59
        %p208 = pneg %p83
        %p209 = pneg %p80
        %p210 = pneg %p104
        %p211 = pneg %p101
        %p212 = pneg %p130
        %p213 = pneg %p127
        %p214 = scmp.lt.s32.totalorder %s20, 1
        %s215 = scalar_select %p214, %s20, 1
        %s216 = smul.addr %s215, 2
        %s217 = smul.addr %s216, 8
        %s218 = scalar_lea.vmem %s4, %s217
        %p219 = pneg %p156
        %p220 = pneg %p153
        %s221 = sand.u32 %s143, 1
        %s222 = scalar_lea.sflag [#allocation3], %s221
        %s223 = sand.u32 %s143, 1
        %s224 = smul.addr %s223, 16
        %s225 = scalar_lea.vmem [#allocation2], %s224
        %p226 = scmp.lt.s32.totalorder %s20, 1
        %s227 = scalar_select %p226, %s20, 1
        %s228 = smul.addr %s227, 4
        %s229 = smul.addr %s228, 8
        %s230 = scalar_lea.vmem %s0, %s229
        %p231 = scmp.lt.s32.totalorder %s20, 1
        %s232 = scalar_select %p231, %s20, 1
        %s233 = smul.addr %s232, 2
        %s234 = smul.addr %s233, 8
        %s235 = scalar_lea.vmem %s4, %s234
        %v237 = vld [vmem:[%s230] sm:$0xff]
        %v238 = vld [vmem:[%s230 + $0x8] sm:$0xff]
        %v239 = vld [vmem:[%s230 + $0x10] sm:$0x3]
        %v240 = vld [vmem:[%s230 + $0x18] sm:$0x3]
        %241 = vrot.lane.b32.xlu0 %v237, 17
        %v242 = vpop.permute.xlu0 %241
        %243 = vrot.lane.b32.xlu0 %v239, 17
        %v244 = vpop.permute.xlu0 %243
        %245 = vrot.lane.b32.xlu0 %v238, 17
        %v246 = vpop.permute.xlu0 %245
        %247 = vrot.lane.b32.xlu0 %v240, 17
        %v248 = vpop.permute.xlu0 %247
        %v249 = vlaneseq
        %v250 = vand.u32 %v249, 127
        %vm251 = vcmp.lt.s32.totalorder %v250, 17
        %v252 = vsel %vm251, %v242, %v246
        %v253 = vsel %vm251, %v244, %v248
        %v254 = vsel %vm251, %v246, %v242
        %v255 = vsel %vm251, %v248, %v244
        %v256 = vld [vmem:[%s3] sm:$0x3]
        %v258 = vlaneseq
        %v259 = vshrl.u32 %v258, 7
        %v260 = vsub.s32 0, %v259
        %v261 = vrot.slane %v256, %v260
        %v262 = vlaneseq
        %v263 = vshrl.u32 %v262, 7
        %v264 = vsub.s32 1, %v263
        %v265 = vrot.slane %v256, %v264
        %v268 = vmul.f32 %v254, %v261
        %v269 = vmul.f32 %v252, %v265
        %v270 = vmul.f32 %v255, %v261
        %v271 = vmul.f32 %v253, %v265
        %v272 = vpack.c.bf16 %v270, %v268
        %v273 = vpack.c.bf16 %v271, %v269
        %v274 = vld [vmem:[%s1] sm:$0xf]
        %275 = vrot.lane.b32.xlu0 %v237, 16
        %v276 = vpop.permute.xlu0 %275
        %277 = vrot.lane.b32.xlu0 %v239, 16
        %v278 = vpop.permute.xlu0 %277
        %279 = vrot.lane.b32.xlu0 %v238, 16
        %v280 = vpop.permute.xlu0 %279
        %281 = vrot.lane.b32.xlu0 %v240, 16
        %v282 = vpop.permute.xlu0 %281
        %vm283 = vcmp.lt.s32.totalorder %v250, 16
        %v284 = vsel %vm283, %v276, %v280
        %v285 = vsel %vm283, %v278, %v282
        %v286 = vsel %vm283, %v280, %v276
        %v287 = vsel %vm283, %v282, %v278
        %s288 = scalar_lea.vmem %s3, 2
        %v289 = vld [vmem:[%s288] sm:$0x3]
        %v291 = vlaneseq
        %v292 = vshrl.u32 %v291, 7
        %v293 = vsub.s32 0, %v292
        %v294 = vrot.slane %v289, %v293
        %v295 = vlaneseq
        %v296 = vshrl.u32 %v295, 7
        %v297 = vsub.s32 1, %v296
        %v298 = vrot.slane %v289, %v297
        %v301 = vmul.f32 %v286, %v294
        %v302 = vmul.f32 %v284, %v298
        %v303 = vmul.f32 %v287, %v294
        %v304 = vmul.f32 %v285, %v298
        %v305 = vpack.c.bf16 %v303, %v301
        %v306 = vpack.c.bf16 %v304, %v302
        %s307 = scalar_lea.vmem %s1, 4
        %v308 = vld [vmem:[%s307] sm:$0xf]
        %vm309 = vcmask 80896
        %v311 = vsel %vm309, %v308, 0
        %vm313 = vcmask 1044480
        %v315 = vsel %vm313, %v305, 0
        %v318 = vsel %vm313, %v306, 0
        %320 = vmatprep.subr.bf16.mxu0 0
        %321 = vmatpush1.bf16.msra.mxu0 0
        %322 = vmatprep.subr.bf16.mxu0 0
        %323 = vmatpush1.bf16.msra.mxu0 0
        %324 = vmatprep.subr.bf16.mxu0 0
        %325 = vmatpush1.bf16.msra.mxu0 0
        %326 = vmatprep.subr.bf16.mxu0 0
        %327 = vmatpush1.bf16.msra.mxu0 0
        %328 = vmatprep.subr.bf16.mxu0 0
        %329 = vmatpush1.bf16.msra.mxu0 0
        %330 = vmatprep.subr.bf16.mxu0 0
        %331 = vmatpush1.bf16.msra.mxu0 0
        %332 = vmatprep.subr.bf16.mxu0 0
        %333 = vmatpush1.bf16.msra.mxu0 0
        %334 = vmatprep.subr.bf16.mxu0 %v318
        %335 = vmatpush1.bf16.msra.mxu0 %v315
        %336 = vmatprep.subr.bf16.mxu0 0
        %337 = vmatpush2.bf16.msra.mxu0 0
        %338 = vmatprep.subr.bf16.mxu0 0
        %339 = vmatpush2.bf16.msra.mxu0 0
        %340 = vmatprep.subr.bf16.mxu0 0
        %341 = vmatpush2.bf16.msra.mxu0 0
        %342 = vmatprep.subr.bf16.mxu0 0
        %343 = vmatpush2.bf16.msra.mxu0 0
        %344 = vmatprep.subr.bf16.mxu0 0
        %345 = vmatpush2.bf16.msra.mxu0 0
        %346 = vmatprep.subr.bf16.mxu0 0
        %347 = vmatpush2.bf16.msra.mxu0 0
        %348 = vmatprep.subr.bf16.mxu0 0
        %349 = vmatpush2.bf16.msra.mxu0 0
        %350 = vmatprep.subr.bf16.mxu0 0
        %351 = vmatpush2.bf16.msra.mxu0 0
        %352 = vmatprep.mubr.bf16.mxu0 0
        %353 = vmatmul.mubr.bf16.gmra.mxu0 %v311
        %v354 = vpop.f32.mrf.mxu0
        %v355 = vadd.f32 0.0, %v354
        %v356 = vpop.f32.mrf.mxu0
        %v357 = vadd.f32 0.0, %v356
        %v358 = vpop.f32.mrf.mxu0
        %v359 = vpop.f32.mrf.mxu0
        %360 = vdwg.mxu0
        %v362 = vsel %vm309, %v274, 0
        %v365 = vsel %vm313, %v272, 0
        %v368 = vsel %vm313, %v273, 0
        %370 = vmatprep.subr.bf16.mxu0 0
        %371 = vmatpush1.bf16.msra.mxu0 0
        %372 = vmatprep.subr.bf16.mxu0 0
        %373 = vmatpush1.bf16.msra.mxu0 0
        %374 = vmatprep.subr.bf16.mxu0 0
        %375 = vmatpush1.bf16.msra.mxu0 0
        %376 = vmatprep.subr.bf16.mxu0 0
        %377 = vmatpush1.bf16.msra.mxu0 0
        %378 = vmatprep.subr.bf16.mxu0 0
        %379 = vmatpush1.bf16.msra.mxu0 0
        %380 = vmatprep.subr.bf16.mxu0 0
        %381 = vmatpush1.bf16.msra.mxu0 0
        %382 = vmatprep.subr.bf16.mxu0 0
        %383 = vmatpush1.bf16.msra.mxu0 0
        %384 = vmatprep.subr.bf16.mxu0 %v368
        %385 = vmatpush1.bf16.msra.mxu0 %v365
        %386 = vmatprep.subr.bf16.mxu0 0
        %387 = vmatpush2.bf16.msra.mxu0 0
        %388 = vmatprep.subr.bf16.mxu0 0
        %389 = vmatpush2.bf16.msra.mxu0 0
        %390 = vmatprep.subr.bf16.mxu0 0
        %391 = vmatpush2.bf16.msra.mxu0 0
        %392 = vmatprep.subr.bf16.mxu0 0
        %393 = vmatpush2.bf16.msra.mxu0 0
        %394 = vmatprep.subr.bf16.mxu0 0
        %395 = vmatpush2.bf16.msra.mxu0 0
        %396 = vmatprep.subr.bf16.mxu0 0
        %397 = vmatpush2.bf16.msra.mxu0 0
        %398 = vmatprep.subr.bf16.mxu0 0
        %399 = vmatpush2.bf16.msra.mxu0 0
        %400 = vmatprep.subr.bf16.mxu0 0
        %401 = vmatpush2.bf16.msra.mxu0 0
        %402 = vmatprep.mubr.bf16.mxu0 0
        %403 = vmatmul.mubr.bf16.gmra.mxu0 %v362
        %v404 = vpop.f32.mrf.mxu0
        %v405 = vadd.f32 %v355, %v404
        %v406 = vpop.f32.mrf.mxu0
        %v407 = vadd.f32 %v357, %v406
        %v408 = vpop.f32.mrf.mxu0
        %v409 = vpop.f32.mrf.mxu0
        %410 = vdwg.mxu0
        %411 = vrot.lane.b32.xlu0 %v237, 15
        %v412 = vpop.permute.xlu0 %411
        %413 = vrot.lane.b32.xlu0 %v239, 15
        %v414 = vpop.permute.xlu0 %413
        %415 = vrot.lane.b32.xlu0 %v238, 15
        %v416 = vpop.permute.xlu0 %415
        %417 = vrot.lane.b32.xlu0 %v240, 15
        %v418 = vpop.permute.xlu0 %417
        %vm419 = vcmp.lt.s32.totalorder %v250, 15
        %v420 = vsel %vm419, %v412, %v416
        %v421 = vsel %vm419, %v414, %v418
        %v422 = vsel %vm419, %v416, %v412
        %v423 = vsel %vm419, %v418, %v414
        %s424 = scalar_lea.vmem %s3, 4
        %v425 = vld [vmem:[%s424] sm:$0x3]
        %v427 = vlaneseq
        %v428 = vshrl.u32 %v427, 7
        %v429 = vsub.s32 0, %v428
        %v430 = vrot.slane %v425, %v429
        %v431 = vlaneseq
        %v432 = vshrl.u32 %v431, 7
        %v433 = vsub.s32 1, %v432
        %v434 = vrot.slane %v425, %v433
        %v437 = vmul.f32 %v422, %v430
        %v438 = vmul.f32 %v420, %v434
        %v439 = vmul.f32 %v423, %v430
        %v440 = vmul.f32 %v421, %v434
        %v441 = vpack.c.bf16 %v439, %v437
        %v442 = vpack.c.bf16 %v440, %v438
        %s443 = scalar_lea.vmem %s1, 8
        %v444 = vld [vmem:[%s443] sm:$0xf]
        %v446 = vsel %vm309, %v444, 0
        %v449 = vsel %vm313, %v441, 0
        %v452 = vsel %vm313, %v442, 0
        %454 = vmatprep.subr.bf16.mxu0 0
        %455 = vmatpush1.bf16.msra.mxu0 0
        %456 = vmatprep.subr.bf16.mxu0 0
        %457 = vmatpush1.bf16.msra.mxu0 0
        %458 = vmatprep.subr.bf16.mxu0 0
        %459 = vmatpush1.bf16.msra.mxu0 0
        %460 = vmatprep.subr.bf16.mxu0 0
        %461 = vmatpush1.bf16.msra.mxu0 0
        %462 = vmatprep.subr.bf16.mxu0 0
        %463 = vmatpush1.bf16.msra.mxu0 0
        %464 = vmatprep.subr.bf16.mxu0 0
        %465 = vmatpush1.bf16.msra.mxu0 0
        %466 = vmatprep.subr.bf16.mxu0 0
        %467 = vmatpush1.bf16.msra.mxu0 0
        %468 = vmatprep.subr.bf16.mxu0 %v452
        %469 = vmatpush1.bf16.msra.mxu0 %v449
        %470 = vmatprep.subr.bf16.mxu0 0
        %471 = vmatpush2.bf16.msra.mxu0 0
        %472 = vmatprep.subr.bf16.mxu0 0
        %473 = vmatpush2.bf16.msra.mxu0 0
        %474 = vmatprep.subr.bf16.mxu0 0
        %475 = vmatpush2.bf16.msra.mxu0 0
        %476 = vmatprep.subr.bf16.mxu0 0
        %477 = vmatpush2.bf16.msra.mxu0 0
        %478 = vmatprep.subr.bf16.mxu0 0
        %479 = vmatpush2.bf16.msra.mxu0 0
        %480 = vmatprep.subr.bf16.mxu0 0
        %481 = vmatpush2.bf16.msra.mxu0 0
        %482 = vmatprep.subr.bf16.mxu0 0
        %483 = vmatpush2.bf16.msra.mxu0 0
        %484 = vmatprep.subr.bf16.mxu0 0
        %485 = vmatpush2.bf16.msra.mxu0 0
        %486 = vmatprep.mubr.bf16.mxu0 0
        %487 = vmatmul.mubr.bf16.gmra.mxu0 %v446
        %v488 = vpop.f32.mrf.mxu0
        %v489 = vadd.f32 0.0, %v488
        %v490 = vpop.f32.mrf.mxu0
        %v491 = vadd.f32 0.0, %v490
        %v492 = vpop.f32.mrf.mxu0
        %v493 = vpop.f32.mrf.mxu0
        %494 = vdwg.mxu0
        %v495 = vadd.f32 %v405, %v489
        %v496 = vadd.f32 %v407, %v491
        %497 = vrot.lane.b32.xlu0 %v237, 1
        %v498 = vpop.permute.xlu0 %497
        %499 = vrot.lane.b32.xlu0 %v239, 1
        %v500 = vpop.permute.xlu0 %499
        %501 = vrot.lane.b32.xlu0 %v238, 1
        %v502 = vpop.permute.xlu0 %501
        %503 = vrot.lane.b32.xlu0 %v240, 1
        %v504 = vpop.permute.xlu0 %503
        %vm505 = vcmp.lt.s32.totalorder %v250, 1
        %v506 = vsel %vm505, %v498, %v502
        %v507 = vsel %vm505, %v500, %v504
        %v508 = vsel %vm505, %v502, %v498
        %v509 = vsel %vm505, %v504, %v500
        %s510 = scalar_lea.vmem %s3, 6
        %v511 = vld [vmem:[%s510] sm:$0x3]
        %v513 = vlaneseq
        %v514 = vshrl.u32 %v513, 7
        %v515 = vsub.s32 0, %v514
        %v516 = vrot.slane %v511, %v515
        %v517 = vlaneseq
        %v518 = vshrl.u32 %v517, 7
        %v519 = vsub.s32 1, %v518
        %v520 = vrot.slane %v511, %v519
        %v523 = vmul.f32 %v508, %v516
        %v524 = vmul.f32 %v506, %v520
        %v525 = vmul.f32 %v509, %v516
        %v526 = vmul.f32 %v507, %v520
        %v527 = vpack.c.bf16 %v525, %v523
        %v528 = vpack.c.bf16 %v526, %v524
        %s529 = scalar_lea.vmem %s1, 12
        %v530 = vld [vmem:[%s529] sm:$0xf]
        %v532 = vsel %vm309, %v530, 0
        %v535 = vsel %vm313, %v527, 0
        %v538 = vsel %vm313, %v528, 0
        %540 = vmatprep.subr.bf16.mxu0 0
        %541 = vmatpush1.bf16.msra.mxu0 0
        %542 = vmatprep.subr.bf16.mxu0 0
        %543 = vmatpush1.bf16.msra.mxu0 0
        %544 = vmatprep.subr.bf16.mxu0 0
        %545 = vmatpush1.bf16.msra.mxu0 0
        %546 = vmatprep.subr.bf16.mxu0 0
        %547 = vmatpush1.bf16.msra.mxu0 0
        %548 = vmatprep.subr.bf16.mxu0 0
        %549 = vmatpush1.bf16.msra.mxu0 0
        %550 = vmatprep.subr.bf16.mxu0 0
        %551 = vmatpush1.bf16.msra.mxu0 0
        %552 = vmatprep.subr.bf16.mxu0 0
        %553 = vmatpush1.bf16.msra.mxu0 0
        %554 = vmatprep.subr.bf16.mxu0 %v538
        %555 = vmatpush1.bf16.msra.mxu0 %v535
        %556 = vmatprep.subr.bf16.mxu0 0
        %557 = vmatpush2.bf16.msra.mxu0 0
        %558 = vmatprep.subr.bf16.mxu0 0
        %559 = vmatpush2.bf16.msra.mxu0 0
        %560 = vmatprep.subr.bf16.mxu0 0
        %561 = vmatpush2.bf16.msra.mxu0 0
        %562 = vmatprep.subr.bf16.mxu0 0
        %563 = vmatpush2.bf16.msra.mxu0 0
        %564 = vmatprep.subr.bf16.mxu0 0
        %565 = vmatpush2.bf16.msra.mxu0 0
        %566 = vmatprep.subr.bf16.mxu0 0
        %567 = vmatpush2.bf16.msra.mxu0 0
        %568 = vmatprep.subr.bf16.mxu0 0
        %569 = vmatpush2.bf16.msra.mxu0 0
        %570 = vmatprep.subr.bf16.mxu0 0
        %571 = vmatpush2.bf16.msra.mxu0 0
        %572 = vmatprep.mubr.bf16.mxu0 0
        %573 = vmatmul.mubr.bf16.gmra.mxu0 %v532
        %v574 = vpop.f32.mrf.mxu0
        %v575 = vadd.f32 0.0, %v574
        %v576 = vpop.f32.mrf.mxu0
        %v577 = vadd.f32 0.0, %v576
        %v578 = vpop.f32.mrf.mxu0
        %v579 = vpop.f32.mrf.mxu0
        %580 = vdwg.mxu0
        %v581 = vadd.f32 %v495, %v575
        %v582 = vadd.f32 %v496, %v577
        %s583 = scalar_lea.vmem %s3, 8
        %v584 = vld [vmem:[%s583] sm:$0x3]
        %v586 = vlaneseq
        %v587 = vshrl.u32 %v586, 7
        %v588 = vsub.s32 0, %v587
        %v589 = vrot.slane %v584, %v588
        %v590 = vlaneseq
        %v591 = vshrl.u32 %v590, 7
        %v592 = vsub.s32 1, %v591
        %v593 = vrot.slane %v584, %v592
        %v596 = vmul.f32 %v237, %v589
        %v597 = vmul.f32 %v238, %v593
        %v598 = vmul.f32 %v239, %v589
        %v599 = vmul.f32 %v240, %v593
        %v600 = vpack.c.bf16 %v598, %v596
        %v601 = vpack.c.bf16 %v599, %v597
        %s602 = scalar_lea.vmem %s1, 16
        %v603 = vld [vmem:[%s602] sm:$0xf]
        %v605 = vsel %vm309, %v603, 0
        %v608 = vsel %vm313, %v600, 0
        %v611 = vsel %vm313, %v601, 0
        %613 = vmatprep.subr.bf16.mxu0 0
        %614 = vmatpush1.bf16.msra.mxu0 0
        %615 = vmatprep.subr.bf16.mxu0 0
        %616 = vmatpush1.bf16.msra.mxu0 0
        %617 = vmatprep.subr.bf16.mxu0 0
        %618 = vmatpush1.bf16.msra.mxu0 0
        %619 = vmatprep.subr.bf16.mxu0 0
        %620 = vmatpush1.bf16.msra.mxu0 0
        %621 = vmatprep.subr.bf16.mxu0 0
        %622 = vmatpush1.bf16.msra.mxu0 0
        %623 = vmatprep.subr.bf16.mxu0 0
        %624 = vmatpush1.bf16.msra.mxu0 0
        %625 = vmatprep.subr.bf16.mxu0 0
        %626 = vmatpush1.bf16.msra.mxu0 0
        %627 = vmatprep.subr.bf16.mxu0 %v611
        %628 = vmatpush1.bf16.msra.mxu0 %v608
        %629 = vmatprep.subr.bf16.mxu0 0
        %630 = vmatpush2.bf16.msra.mxu0 0
        %631 = vmatprep.subr.bf16.mxu0 0
        %632 = vmatpush2.bf16.msra.mxu0 0
        %633 = vmatprep.subr.bf16.mxu0 0
        %634 = vmatpush2.bf16.msra.mxu0 0
        %635 = vmatprep.subr.bf16.mxu0 0
        %636 = vmatpush2.bf16.msra.mxu0 0
        %637 = vmatprep.subr.bf16.mxu0 0
        %638 = vmatpush2.bf16.msra.mxu0 0
        %639 = vmatprep.subr.bf16.mxu0 0
        %640 = vmatpush2.bf16.msra.mxu0 0
        %641 = vmatprep.subr.bf16.mxu0 0
        %642 = vmatpush2.bf16.msra.mxu0 0
        %643 = vmatprep.subr.bf16.mxu0 0
        %644 = vmatpush2.bf16.msra.mxu0 0
        %645 = vmatprep.mubr.bf16.mxu0 0
        %646 = vmatmul.mubr.bf16.gmra.mxu0 %v605
        %v647 = vpop.f32.mrf.mxu0
        %v648 = vadd.f32 0.0, %v647
        %v649 = vpop.f32.mrf.mxu0
        %v650 = vadd.f32 0.0, %v649
        %v651 = vpop.f32.mrf.mxu0
        %v652 = vpop.f32.mrf.mxu0
        %653 = vdwg.mxu0
        %v654 = vadd.f32 %v581, %v648
        %v655 = vadd.f32 %v582, %v650
        %656 = vrot.lane.b32.xlu0 %v237, 127
        %v657 = vpop.permute.xlu0 %656
        %658 = vrot.lane.b32.xlu0 %v239, 127
        %v659 = vpop.permute.xlu0 %658
        %660 = vrot.lane.b32.xlu0 %v238, 127
        %v661 = vpop.permute.xlu0 %660
        %662 = vrot.lane.b32.xlu0 %v240, 127
        %v663 = vpop.permute.xlu0 %662
        %vm664 = vcmp.lt.s32.totalorder %v250, 127
        %v665 = vsel %vm664, %v657, %v661
        %v666 = vsel %vm664, %v659, %v663
        %v667 = vsel %vm664, %v661, %v657
        %v668 = vsel %vm664, %v663, %v659
        %s669 = scalar_lea.vmem %s3, 10
        %v670 = vld [vmem:[%s669] sm:$0x3]
        %v672 = vlaneseq
        %v673 = vshrl.u32 %v672, 7
        %v674 = vsub.s32 0, %v673
        %v675 = vrot.slane %v670, %v674
        %v676 = vlaneseq
        %v677 = vshrl.u32 %v676, 7
        %v678 = vsub.s32 1, %v677
        %v679 = vrot.slane %v670, %v678
        %v682 = vmul.f32 %v665, %v675
        %v683 = vmul.f32 %v667, %v679
        %v684 = vmul.f32 %v666, %v675
        %v685 = vmul.f32 %v668, %v679
        %v686 = vpack.c.bf16 %v684, %v682
        %v687 = vpack.c.bf16 %v685, %v683
        %s688 = scalar_lea.vmem %s1, 20
        %v689 = vld [vmem:[%s688] sm:$0xf]
        %v691 = vsel %vm309, %v689, 0
        %v694 = vsel %vm313, %v686, 0
        %v697 = vsel %vm313, %v687, 0
        %699 = vmatprep.subr.bf16.mxu0 0
        %700 = vmatpush1.bf16.msra.mxu0 0
        %701 = vmatprep.subr.bf16.mxu0 0
        %702 = vmatpush1.bf16.msra.mxu0 0
        %703 = vmatprep.subr.bf16.mxu0 0
        %704 = vmatpush1.bf16.msra.mxu0 0
        %705 = vmatprep.subr.bf16.mxu0 0
        %706 = vmatpush1.bf16.msra.mxu0 0
        %707 = vmatprep.subr.bf16.mxu0 0
        %708 = vmatpush1.bf16.msra.mxu0 0
        %709 = vmatprep.subr.bf16.mxu0 0
        %710 = vmatpush1.bf16.msra.mxu0 0
        %711 = vmatprep.subr.bf16.mxu0 0
        %712 = vmatpush1.bf16.msra.mxu0 0
        %713 = vmatprep.subr.bf16.mxu0 %v697
        %714 = vmatpush1.bf16.msra.mxu0 %v694
        %715 = vmatprep.subr.bf16.mxu0 0
        %716 = vmatpush2.bf16.msra.mxu0 0
        %717 = vmatprep.subr.bf16.mxu0 0
        %718 = vmatpush2.bf16.msra.mxu0 0
        %719 = vmatprep.subr.bf16.mxu0 0
        %720 = vmatpush2.bf16.msra.mxu0 0
        %721 = vmatprep.subr.bf16.mxu0 0
        %722 = vmatpush2.bf16.msra.mxu0 0
        %723 = vmatprep.subr.bf16.mxu0 0
        %724 = vmatpush2.bf16.msra.mxu0 0
        %725 = vmatprep.subr.bf16.mxu0 0
        %726 = vmatpush2.bf16.msra.mxu0 0
        %727 = vmatprep.subr.bf16.mxu0 0
        %728 = vmatpush2.bf16.msra.mxu0 0
        %729 = vmatprep.subr.bf16.mxu0 0
        %730 = vmatpush2.bf16.msra.mxu0 0
        %731 = vmatprep.mubr.bf16.mxu0 0
        %732 = vmatmul.mubr.bf16.gmra.mxu0 %v691
        %v733 = vpop.f32.mrf.mxu0
        %v734 = vadd.f32 0.0, %v733
        %v735 = vpop.f32.mrf.mxu0
        %v736 = vadd.f32 0.0, %v735
        %v737 = vpop.f32.mrf.mxu0
        %v738 = vpop.f32.mrf.mxu0
        %739 = vdwg.mxu0
        %v740 = vadd.f32 %v654, %v734
        %v741 = vadd.f32 %v655, %v736
        %742 = vrot.lane.b32.xlu0 %v237, 113
        %v743 = vpop.permute.xlu0 %742
        %744 = vrot.lane.b32.xlu0 %v239, 113
        %v745 = vpop.permute.xlu0 %744
        %746 = vrot.lane.b32.xlu0 %v238, 113
        %v747 = vpop.permute.xlu0 %746
        %748 = vrot.lane.b32.xlu0 %v240, 113
        %v749 = vpop.permute.xlu0 %748
        %vm750 = vcmp.lt.s32.totalorder %v250, 113
        %v751 = vsel %vm750, %v743, %v747
        %v752 = vsel %vm750, %v745, %v749
        %v753 = vsel %vm750, %v747, %v743
        %v754 = vsel %vm750, %v749, %v745
        %s755 = scalar_lea.vmem %s3, 12
        %v756 = vld [vmem:[%s755] sm:$0x3]
        %v758 = vlaneseq
        %v759 = vshrl.u32 %v758, 7
        %v760 = vsub.s32 0, %v759
        %v761 = vrot.slane %v756, %v760
        %v762 = vlaneseq
        %v763 = vshrl.u32 %v762, 7
        %v764 = vsub.s32 1, %v763
        %v765 = vrot.slane %v756, %v764
        %v768 = vmul.f32 %v751, %v761
        %v769 = vmul.f32 %v753, %v765
        %v770 = vmul.f32 %v752, %v761
        %v771 = vmul.f32 %v754, %v765
        %v772 = vpack.c.bf16 %v770, %v768
        %v773 = vpack.c.bf16 %v771, %v769
        %s774 = scalar_lea.vmem %s1, 24
        %v775 = vld [vmem:[%s774] sm:$0xf]
        %v777 = vsel %vm309, %v775, 0
        %v780 = vsel %vm313, %v772, 0
        %v783 = vsel %vm313, %v773, 0
        %785 = vmatprep.subr.bf16.mxu0 0
        %786 = vmatpush1.bf16.msra.mxu0 0
        %787 = vmatprep.subr.bf16.mxu0 0
        %788 = vmatpush1.bf16.msra.mxu0 0
        %789 = vmatprep.subr.bf16.mxu0 0
        %790 = vmatpush1.bf16.msra.mxu0 0
        %791 = vmatprep.subr.bf16.mxu0 0
        %792 = vmatpush1.bf16.msra.mxu0 0
        %793 = vmatprep.subr.bf16.mxu0 0
        %794 = vmatpush1.bf16.msra.mxu0 0
        %795 = vmatprep.subr.bf16.mxu0 0
        %796 = vmatpush1.bf16.msra.mxu0 0
        %797 = vmatprep.subr.bf16.mxu0 0
        %798 = vmatpush1.bf16.msra.mxu0 0
        %799 = vmatprep.subr.bf16.mxu0 %v783
        %800 = vmatpush1.bf16.msra.mxu0 %v780
        %801 = vmatprep.subr.bf16.mxu0 0
        %802 = vmatpush2.bf16.msra.mxu0 0
        %803 = vmatprep.subr.bf16.mxu0 0
        %804 = vmatpush2.bf16.msra.mxu0 0
        %805 = vmatprep.subr.bf16.mxu0 0
        %806 = vmatpush2.bf16.msra.mxu0 0
        %807 = vmatprep.subr.bf16.mxu0 0
        %808 = vmatpush2.bf16.msra.mxu0 0
        %809 = vmatprep.subr.bf16.mxu0 0
        %810 = vmatpush2.bf16.msra.mxu0 0
        %811 = vmatprep.subr.bf16.mxu0 0
        %812 = vmatpush2.bf16.msra.mxu0 0
        %813 = vmatprep.subr.bf16.mxu0 0
        %814 = vmatpush2.bf16.msra.mxu0 0
        %815 = vmatprep.subr.bf16.mxu0 0
        %816 = vmatpush2.bf16.msra.mxu0 0
        %817 = vmatprep.mubr.bf16.mxu0 0
        %818 = vmatmul.mubr.bf16.gmra.mxu0 %v777
        %v819 = vpop.f32.mrf.mxu0
        %v820 = vadd.f32 0.0, %v819
        %v821 = vpop.f32.mrf.mxu0
        %v822 = vadd.f32 0.0, %v821
        %v823 = vpop.f32.mrf.mxu0
        %v824 = vpop.f32.mrf.mxu0
        %825 = vdwg.mxu0
        %v826 = vadd.f32 %v740, %v820
        %v827 = vadd.f32 %v741, %v822
        %828 = vrot.lane.b32.xlu0 %v237, 112
        %v829 = vpop.permute.xlu0 %828
        %830 = vrot.lane.b32.xlu0 %v239, 112
        %v831 = vpop.permute.xlu0 %830
        %832 = vrot.lane.b32.xlu0 %v238, 112
        %v833 = vpop.permute.xlu0 %832
        %834 = vrot.lane.b32.xlu0 %v240, 112
        %v835 = vpop.permute.xlu0 %834
        %vm836 = vcmp.lt.s32.totalorder %v250, 112
        %v837 = vsel %vm836, %v829, %v833
        %v838 = vsel %vm836, %v831, %v835
        %v839 = vsel %vm836, %v833, %v829
        %v840 = vsel %vm836, %v835, %v831
        %s841 = scalar_lea.vmem %s3, 14
        %v842 = vld [vmem:[%s841] sm:$0x3]
        %v844 = vlaneseq
        %v845 = vshrl.u32 %v844, 7
        %v846 = vsub.s32 0, %v845
        %v847 = vrot.slane %v842, %v846
        %v848 = vlaneseq
        %v849 = vshrl.u32 %v848, 7
        %v850 = vsub.s32 1, %v849
        %v851 = vrot.slane %v842, %v850
        %v854 = vmul.f32 %v837, %v847
        %v855 = vmul.f32 %v839, %v851
        %v856 = vmul.f32 %v838, %v847
        %v857 = vmul.f32 %v840, %v851
        %v858 = vpack.c.bf16 %v856, %v854
        %v859 = vpack.c.bf16 %v857, %v855
        %s860 = scalar_lea.vmem %s1, 28
        %v861 = vld [vmem:[%s860] sm:$0xf]
        %v863 = vsel %vm309, %v861, 0
        %v866 = vsel %vm313, %v858, 0
        %v869 = vsel %vm313, %v859, 0
        %871 = vmatprep.subr.bf16.mxu0 0
        %872 = vmatpush1.bf16.msra.mxu0 0
        %873 = vmatprep.subr.bf16.mxu0 0
        %874 = vmatpush1.bf16.msra.mxu0 0
        %875 = vmatprep.subr.bf16.mxu0 0
        %876 = vmatpush1.bf16.msra.mxu0 0
        %877 = vmatprep.subr.bf16.mxu0 0
        %878 = vmatpush1.bf16.msra.mxu0 0
        %879 = vmatprep.subr.bf16.mxu0 0
        %880 = vmatpush1.bf16.msra.mxu0 0
        %881 = vmatprep.subr.bf16.mxu0 0
        %882 = vmatpush1.bf16.msra.mxu0 0
        %883 = vmatprep.subr.bf16.mxu0 0
        %884 = vmatpush1.bf16.msra.mxu0 0
        %885 = vmatprep.subr.bf16.mxu0 %v869
        %886 = vmatpush1.bf16.msra.mxu0 %v866
        %887 = vmatprep.subr.bf16.mxu0 0
        %888 = vmatpush2.bf16.msra.mxu0 0
        %889 = vmatprep.subr.bf16.mxu0 0
        %890 = vmatpush2.bf16.msra.mxu0 0
        %891 = vmatprep.subr.bf16.mxu0 0
        %892 = vmatpush2.bf16.msra.mxu0 0
        %893 = vmatprep.subr.bf16.mxu0 0
        %894 = vmatpush2.bf16.msra.mxu0 0
        %895 = vmatprep.subr.bf16.mxu0 0
        %896 = vmatpush2.bf16.msra.mxu0 0
        %897 = vmatprep.subr.bf16.mxu0 0
        %898 = vmatpush2.bf16.msra.mxu0 0
        %899 = vmatprep.subr.bf16.mxu0 0
        %900 = vmatpush2.bf16.msra.mxu0 0
        %901 = vmatprep.subr.bf16.mxu0 0
        %902 = vmatpush2.bf16.msra.mxu0 0
        %903 = vmatprep.mubr.bf16.mxu0 0
        %904 = vmatmul.mubr.bf16.gmra.mxu0 %v863
        %v905 = vpop.f32.mrf.mxu0
        %v906 = vadd.f32 0.0, %v905
        %v907 = vpop.f32.mrf.mxu0
        %v908 = vadd.f32 0.0, %v907
        %v909 = vpop.f32.mrf.mxu0
        %v910 = vpop.f32.mrf.mxu0
        %911 = vdwg.mxu0
        %v912 = vadd.f32 %v826, %v906
        %v913 = vadd.f32 %v827, %v908
        %914 = vrot.lane.b32.xlu0 %v237, 111
        %v915 = vpop.permute.xlu0 %914
        %916 = vrot.lane.b32.xlu0 %v239, 111
        %v917 = vpop.permute.xlu0 %916
        %918 = vrot.lane.b32.xlu0 %v238, 111
        %v919 = vpop.permute.xlu0 %918
        %920 = vrot.lane.b32.xlu0 %v240, 111
        %v921 = vpop.permute.xlu0 %920
        %vm922 = vcmp.lt.s32.totalorder %v250, 111
        %v923 = vsel %vm922, %v915, %v919
        %v924 = vsel %vm922, %v917, %v921
        %v925 = vsel %vm922, %v919, %v915
        %v926 = vsel %vm922, %v921, %v917
        %s927 = scalar_lea.vmem %s3, 16
        %v928 = vld [vmem:[%s927] sm:$0x3]
        %v930 = vlaneseq
        %v931 = vshrl.u32 %v930, 7
        %v932 = vsub.s32 0, %v931
        %v933 = vrot.slane %v928, %v932
        %v934 = vlaneseq
        %v935 = vshrl.u32 %v934, 7
        %v936 = vsub.s32 1, %v935
        %v937 = vrot.slane %v928, %v936
        %v940 = vmul.f32 %v923, %v933
        %v941 = vmul.f32 %v925, %v937
        %v942 = vmul.f32 %v924, %v933
        %v943 = vmul.f32 %v926, %v937
        %v944 = vpack.c.bf16 %v942, %v940
        %v945 = vpack.c.bf16 %v943, %v941
        %s946 = scalar_lea.vmem %s1, 32
        %v947 = vld [vmem:[%s946] sm:$0xf]
        %v949 = vsel %vm309, %v947, 0
        %v952 = vsel %vm313, %v944, 0
        %v955 = vsel %vm313, %v945, 0
        %957 = vmatprep.subr.bf16.mxu0 0
        %958 = vmatpush1.bf16.msra.mxu0 0
        %959 = vmatprep.subr.bf16.mxu0 0
        %960 = vmatpush1.bf16.msra.mxu0 0
        %961 = vmatprep.subr.bf16.mxu0 0
        %962 = vmatpush1.bf16.msra.mxu0 0
        %963 = vmatprep.subr.bf16.mxu0 0
        %964 = vmatpush1.bf16.msra.mxu0 0
        %965 = vmatprep.subr.bf16.mxu0 0
        %966 = vmatpush1.bf16.msra.mxu0 0
        %967 = vmatprep.subr.bf16.mxu0 0
        %968 = vmatpush1.bf16.msra.mxu0 0
        %969 = vmatprep.subr.bf16.mxu0 0
        %970 = vmatpush1.bf16.msra.mxu0 0
        %971 = vmatprep.subr.bf16.mxu0 %v955
        %972 = vmatpush1.bf16.msra.mxu0 %v952
        %973 = vmatprep.subr.bf16.mxu0 0
        %974 = vmatpush2.bf16.msra.mxu0 0
        %975 = vmatprep.subr.bf16.mxu0 0
        %976 = vmatpush2.bf16.msra.mxu0 0
        %977 = vmatprep.subr.bf16.mxu0 0
        %978 = vmatpush2.bf16.msra.mxu0 0
        %979 = vmatprep.subr.bf16.mxu0 0
        %980 = vmatpush2.bf16.msra.mxu0 0
        %981 = vmatprep.subr.bf16.mxu0 0
        %982 = vmatpush2.bf16.msra.mxu0 0
        %983 = vmatprep.subr.bf16.mxu0 0
        %984 = vmatpush2.bf16.msra.mxu0 0
        %985 = vmatprep.subr.bf16.mxu0 0
        %986 = vmatpush2.bf16.msra.mxu0 0
        %987 = vmatprep.subr.bf16.mxu0 0
        %988 = vmatpush2.bf16.msra.mxu0 0
        %989 = vmatprep.mubr.bf16.mxu0 0
        %990 = vmatmul.mubr.bf16.gmra.mxu0 %v949
        %v991 = vpop.f32.mrf.mxu0
        %v992 = vadd.f32 0.0, %v991
        %v993 = vpop.f32.mrf.mxu0
        %v994 = vadd.f32 0.0, %v993
        %v995 = vpop.f32.mrf.mxu0
        %v996 = vpop.f32.mrf.mxu0
        %997 = vdwg.mxu0
        %v998 = vadd.f32 %v912, %v992
        %v999 = vadd.f32 %v913, %v994
        %v1000 = vld [vmem:[%s2] sm:$0xff]
        %1002 = vset.pattern.permute.xlu0 0
        %1003 = vperm.xlu0 %1002, %v1000
        %v1004 = vpop.permute.xlu0 %1003
        %v1006 = vadd.f32 %v998, %v1004
        %v1007 = vadd.f32 %v999, %v1004
        %vm1008 = vcmp.gt.f32.partialorder %v1006, 0.0
        %vm1009 = vcmp.gt.f32.partialorder %v1007, 0.0
        %v1010 = vsel %vm1008, 1, 0
        %v1011 = vsel %vm1009, 1, 0
        %v1012 = vcvt.s32.f32 %v1010
        %v1013 = vcvt.s32.f32 %v1011
        %v1016 = vrot.slane %v1012, 4
        %v1017 = vrot.slane %v1013, 4
        %v1020 = vadd.f32 %v1006, %v1016
        %v1021 = vadd.f32 %v1007, %v1017
        %vm1022 = vcmp.gt.f32.partialorder %v1020, 0.0
        %vm1023 = vcmp.gt.f32.partialorder %v1021, 0.0
        %v1024 = vsel %vm1022, 1, 0
        %v1025 = vsel %vm1023, 1, 0
        %v1026 = vcvt.s32.f32 %v1024
        %v1027 = vcvt.s32.f32 %v1025
        %1028 = vst [vmem:[%s235] sm:$0xf] %v1012
        %1029 = vst [vmem:[%s235 + $0x8] sm:$0xf] %v1013
        %1030 = vst [vmem:[%s235] sm:$0xf0] %v1026
        %1031 = vst [vmem:[%s235 + $0x8] sm:$0xf0] %v1027
        %v1032 = vmul.f32 %v1006, 0.2
        %v1033 = vmul.f32 %v1007, 0.2
        %v1034 = vsub.f32 1.0, %v1012
        %v1035 = vsub.f32 1.0, %v1013
        %v1036 = vmul.f32 %v1032, %v1034
        %v1037 = vmul.f32 %v1033, %v1035
        %1038 = vst [vmem:[%s225] sm:$0xf] %v1036
        %1039 = vst [vmem:[%s225 + $0x8] sm:$0xf] %v1037
        %v1040 = vmul.f32 %v1020, 0.2
        %v1041 = vmul.f32 %v1021, 0.2
        %v1042 = vsub.f32 1.0, %v1026
        %v1043 = vsub.f32 1.0, %v1027
        %v1044 = vmul.f32 %v1040, %v1042
        %v1045 = vmul.f32 %v1041, %v1043
        %1046 = vst [vmem:[%s225] sm:$0xf0] %v1044
        %1047 = vst [vmem:[%s225 + $0x8] sm:$0xf0] %v1045
        %p1048 = scmp.lt.s32.totalorder %s20, 1
        %s1049 = scalar_select %p1048, %s20, 1
        %s1050 = smul.addr %s1049, 2
        %s1051 = smul.addr %s1050, 8
        %s1052 = scalar_lea.vmem %s4, %s1051
        %s1053 = sand.u32 %s143, 1
        %s1054 = scalar_lea.sflag [#allocation3], %s1053
        %s1055 = sand.u32 %s143, 1
        %s1056 = smul.addr %s1055, 16
        %s1057 = scalar_lea.vmem [#allocation2], %s1056
        // Predicated region
        $region37: #{_lambda_.1} parent=35 // pred_check
          %p1058 = pneg %p127
        $region38: #{_lambda_.1} parent=35 // pred_check_branch
          %1060 = sbr.rel (%p1058) target = $region40
        $region39: #{_lambda_.1} parent=35 // pred_region
          _
        $region40: #{_lambda_.1} parent=35 // pred_fallthru
          _
        // Predicated region
        $region41: #{_lambda_.1} parent=35 // pred_check
          %p1061 = pneg %p153
        $region42: #{_lambda_.1} parent=35 // pred_check_branch
          %1063 = sbr.rel (%p1061) target = $region44
        $region43: #{_lambda_.1} parent=35 // pred_region
          %s1065 = ssub.s32 256, 256
          %1066 = vsyncadd %s1054, %s1065
          %s1067 = smul.addr %s20, 2
          %s1068 = smul.addr %s1067, 128
          %s1069 = scalar_lea.hbm %s5, %s1068
          %s1071 = sshll.u32 %s1057, 4
          %s1072 = int_to_ptr.vmem [resolvable:$true] %s1071
          %1074 = dma.vmem_to_hbm [thread:$0]  %s1072, 256, %s1069, %s1054
        $region44: #{_lambda_.1} parent=35 // pred_fallthru
          _
      $region36: #{_lambda_.1} parent=5 // pred_fallthru
        _
      %p1075 = scmp.le.s32.totalorder 2, %s15
      // Predicated region
      $region45: #{_lambda_.1} parent=5 // pred_check
        %p1076 = pneg %p1075
      $region46: #{_lambda_.1} parent=5 // pred_check_branch
        %1078 = sbr.rel (%p1076) target = $region48
      $region47: #{_lambda_.1} parent=5 // pred_region
        %s1079 = ssub.s32 %s15, 2
        // Predicated region
        $region49: #{_lambda_.1} parent=47 // pred_check
          %p1080 = pneg %p133
        $region50: #{_lambda_.1} parent=47 // pred_check_branch
          %1082 = sbr.rel (%p1080) target = $region52
        $region51: #{_lambda_.1} parent=47 // pred_region
          %p1083 = scmp.lt.s32.totalorder %s21, 1
          %s1084 = scalar_select %p1083, %s21, 1
          %s1085 = smul.addr %s1084, 2
          %s1086 = smul.addr %s1085, 8
          %s1087 = scalar_lea.vmem %s4, %s1086
        $region52: #{_lambda_.1} parent=47 // pred_fallthru
          _
        // Predicated region
        $region53: #{_lambda_.1} parent=47 // pred_check
          %p1088 = pneg %p159
        $region54: #{_lambda_.1} parent=47 // pred_check_branch
          %1090 = sbr.rel (%p1088) target = $region56
        $region55: #{_lambda_.1} parent=47 // pred_region
          %s1091 = sand.u32 %s144, 1
          %s1092 = scalar_lea.sflag [#allocation3], %s1091
          %s1093 = sand.u32 %s144, 1
          %s1094 = smul.addr %s1093, 16
          %s1095 = scalar_lea.vmem [#allocation2], %s1094
          %1096 = dma.done %s1092, 256
        $region56: #{_lambda_.1} parent=47 // pred_fallthru
          _
      $region48: #{_lambda_.1} parent=5 // pred_fallthru
        _
    $region6: #{_lambda_.1} parent=1 // loop_footer
      %s19 = sadd.s32 1, %s15
    $region7: #{_lambda_.1} parent=1 // loop_footer_branch
      %14 = sbr.rel target = $region3
    $region8: #{_lambda_.1} parent=1 // loop_exit
      _
    %1097 = vsyncpa [#allocation3], 1
    %s1098 = scalar_lea.sflag [#allocation3], 1
    %1099 = vsyncpa %s1098, 1

</llo_original>
